<compile_context>
chip_gen: v7x
topology: tpu7x:2x2x1
jax: 0.10.0
libtpu: 0.0.40
codegen_flags: <defaults>
</compile_context>

<pallas_src>
import jax
import jax.numpy as jnp
import numpy as np
from jax import lax
from jax.experimental import pallas as pl
from jax.experimental.pallas import tpu as pltpu


def _make_kernel(Wp, L):
    """Kernel closure over the padded row stride and per-step lane width."""

    def kernel(x_ref, pm_ref,
               s1_ref, t1_ref, w1_ref,
               t2_ref, w2_ref,
               t3_ref, w3_ref, b3_ref,
               o_ref):
        x = x_ref[...]                                     # (Cin, L) f32

        # --- bn1 + relu (f32, VPU) ---
        a = jnp.maximum(x * s1_ref[...] + t1_ref[...], 0.0)

        # --- conv1 (1x1, bn2 scale folded into weights): bf16 MXU, f32 acc ---
        t = jnp.dot(w1_ref[...], a.astype(jnp.bfloat16),
                    preferred_element_type=jnp.float32)    # (P_pad, L)

        # --- bn2 shift + relu; zero pad lanes so halo taps read zeros ---
        t = jnp.maximum(t + t2_ref[...], 0.0) * pm_ref[...]

        # --- conv2 (3x3, stride 1, pad 1) as ONE K=9*P_pad MXU contraction ---
        # The layout has a zero pad column/row per image, so a lane roll by
        # -(dh*Wp + dw) lands every halo tap on a zero lane: no per-tap masks.
        taps = []
        for dh in (-1, 0, 1):
            for dw in (-1, 0, 1):
                delta = dh * Wp + dw
                taps.append(t if delta == 0
                            else pltpu.roll(t, (-delta) % L, axis=1))
        patches = jnp.concatenate(taps, axis=0)            # (9*P_pad, L) f32
        t = jnp.dot(w2_ref[...], patches.astype(jnp.bfloat16),
                    preferred_element_type=jnp.float32)    # (P_pad, L)

        # --- bn3 shift + relu (conv2 bias folded into the shift) ---
        t = jnp.maximum(t + t3_ref[...], 0.0)

        # --- conv3 (1x1) + bias + residual (residual re-read late, f32) ---
        out = jnp.dot(w3_ref[...], t.astype(jnp.bfloat16),
                      preferred_element_type=jnp.float32)  # (Cout, L)
        o_ref[...] = out + b3_ref[...] + x_ref[...]

    return kernel


def bottleneck2d(x_nchw, params, images_per_step=None):
    (g1, be1, m1, v1, w1, b1,
     g2, be2, m2, v2, w2, b2,
     g3, be3, m3, v3, w3, b3) = params
    eps = 1e-5
    N, Cin, H, W = x_nchw.shape
    P = w1.shape[0]
    Cout = w3.shape[0]
    assert Cout == Cin, "residual path requires Cout == Cin (downsample=None)"

    P_pad = -(-P // 8) * 8                  # sublane-align intermediate channels
    Hp, Wp = H + 1, W + 1                   # one zero pad row / column per image
    HWp = Hp * Wp
    HWp_a = -(-HWp // 128) * 128            # lane-align each image
    if images_per_step is None:
        images_per_step = max(1, N // 2)    # keep grid >= 2 (v7x: both TCs busy)
    nb = images_per_step
    assert N % nb == 0
    L = nb * HWp_a                          # lane width handled per grid step

    f32 = jnp.float32

    # Fold BatchNorm (eval mode) into per-channel scale / shift.
    def fold(g, b, m, v):
        s = (g / jnp.sqrt(v + eps)).astype(f32)
        return s, (b - m * s).astype(f32)

    s1, t1 = fold(g1, be1, m1, v1)          # (Cin,)
    s2, t2 = fold(g2, be2, m2, v2)          # (P,)
    s3, t3 = fold(g3, be3, m3, v3)          # (P,)

    # conv1: fold bn2 scale into rows, pad out-channels to P_pad, cast bf16.
    w1f = s2[:, None] * w1[:, :, 0, 0].astype(f32)                    # (P, Cin)
    w1k = jnp.zeros((P_pad, Cin), f32).at[:P].set(w1f).astype(jnp.bfloat16)
    t2k = jnp.zeros((P_pad, 1), f32).at[:P, 0].set(t2 + s2 * b1)      # b1 fold

    # conv2: fold bn3 scale, tap-major layout (P_pad, 9*P_pad), cast bf16.
    w2f = s3[:, None, None, None] * w2.astype(f32)                    # (P,P,3,3)
    w2k = jnp.zeros((P_pad, 9 * P_pad), f32)
    for kh in range(3):
        for kw in range(3):
            k = kh * 3 + kw
            w2k = w2k.at[:P, k * P_pad:k * P_pad + P].set(w2f[:, :, kh, kw])
    w2k = w2k.astype(jnp.bfloat16)
    t3k = jnp.zeros((P_pad, 1), f32).at[:P, 0].set(t3 + s3 * b2)      # b2 fold

    # conv3: pad in-channels to P_pad, cast bf16; bias stays f32.
    w3k = (jnp.zeros((Cout, P_pad), f32)
           .at[:, :P].set(w3[:, :, 0, 0].astype(f32)).astype(jnp.bfloat16))
    b3k = b3.reshape(-1, 1).astype(f32)

    s1k = s1.reshape(-1, 1)
    t1k = t1.reshape(-1, 1)

    # Single pad-lane mask row (1 at real pixels, 0 at pad lanes), tiled nb x.
    pm = np.zeros((Hp, Wp), np.float32)
    pm[:H, :W] = 1.0
    pm_img = np.zeros((HWp_a,), np.float32)
    pm_img[:HWp] = pm.reshape(-1)
    pad_mask = jnp.asarray(np.tile(pm_img, nb)[None, :])              # (1, L)

    # Channel-major whole-batch layout with per-image zero halo + lane align:
    # (N, C, H, W) -> (C, N*HWp_a).  Residual precision requires f32 input.
    xp = jnp.pad(x_nchw.astype(f32), ((0, 0), (0, 0), (0, 1), (0, 1)))
    xp = xp.reshape(N, Cin, HWp)
    xp = jnp.pad(xp, ((0, 0), (0, 0), (0, HWp_a - HWp)))
    xp = jnp.transpose(xp, (1, 0, 2)).reshape(Cin, N * HWp_a)

    def full_spec(a):
        return pl.BlockSpec(a.shape, lambda g, _r=a.ndim: (0,) * _r)

    kernel = _make_kernel(Wp, L)
    out = pl.pallas_call(
        kernel,
        out_shape=jax.ShapeDtypeStruct((Cout, N * HWp_a), f32),
        grid=(N // nb,),
        in_specs=[
            pl.BlockSpec((Cin, L), lambda g: (0, g)),
            full_spec(pad_mask),
            full_spec(s1k), full_spec(t1k), full_spec(w1k),
            full_spec(t2k), full_spec(w2k),
            full_spec(t3k), full_spec(w3k), full_spec(b3k),
        ],
        out_specs=pl.BlockSpec((Cout, L), lambda g: (0, g)),
        compiler_params=pltpu.CompilerParams(
            dimension_semantics=("parallel",),     # v7x: shard batch on 2 TCs
            vmem_limit_bytes=48 * 1024 * 1024),
    )(xp, pad_mask, s1k, t1k, w1k, t2k, w2k, t3k, w3k, b3k)

    # Strip the pad lanes / rows / columns and restore NCHW.
    y = out.reshape(Cout, N, HWp_a)[:, :, :HWp].reshape(Cout, N, Hp, Wp)
    y = y[:, :, :H, :W]
    return jnp.transpose(y, (1, 0, 2, 3))


def reference(x, params):
    """Pure-JAX NCHW reference mirroring the PyTorch forward (eval-mode BN)."""
    (g1, be1, m1, v1, w1, b1,
     g2, be2, m2, v2, w2, b2,
     g3, be3, m3, v3, w3, b3) = params
    eps = 1e-5

    def bn(x, g, b, m, v):
        r = lambda a: a.reshape(1, -1, 1, 1)
        return r(g) * (x - r(m)) / jnp.sqrt(r(v) + eps) + r(b)

    def conv(x, w, b, pad):
        y = lax.conv_general_dilated(
            x, w, (1, 1), pad, dimension_numbers=('NCHW', 'OIHW', 'NCHW'))
        return y + b.reshape(1, -1, 1, 1)

    out = jax.nn.relu(bn(x, g1, be1, m1, v1))
    out = conv(out, w1, b1, 'VALID')
    out = jax.nn.relu(bn(out, g2, be2, m2, v2))
    out = conv(out, w2, b2, ((1, 1), (1, 1)))
    out = jax.nn.relu(bn(out, g3, be3, m3, v3))
    out = conv(out, w3, b3, 'VALID')
    return out + x


if __name__ == "__main__":
    N, inplanes, H, W = 2, 8, 16, 16
    planes = 4   # expansion=2 -> output channels = 8 = inplanes (downsample=None)

    keys = iter(jax.random.split(jax.random.PRNGKey(0), 32))
    nrm = lambda shape, s=0.1: s * jax.random.normal(next(keys), shape, jnp.float32)
    uni = lambda shape: jax.random.uniform(next(keys), shape, jnp.float32, 0.5, 1.5)

    params = (
        # bn1 (gamma, beta, running_mean, running_var)
        uni((inplanes,)), nrm((inplanes,)), nrm((inplanes,)), uni((inplanes,)),
        # conv1: (planes, inplanes, 1, 1)
        nrm((planes, inplanes, 1, 1)), nrm((planes,)),
        # bn2
        uni((planes,)), nrm((planes,)), nrm((planes,)), uni((planes,)),
        # conv2: (planes, planes, 3, 3)
        nrm((planes, planes, 3, 3)), nrm((planes,)),
        # bn3
        uni((planes,)), nrm((planes,)), nrm((planes,)), uni((planes,)),
        # conv3: (2*planes, planes, 1, 1)
        nrm((planes * 2, planes, 1, 1)), nrm((planes * 2,)),
    )
    x = jax.random.normal(next(keys), (N, inplanes, H, W), jnp.float32)

    y = jax.block_until_ready(bottleneck2d(x, params))
    y_ref = reference(x, params)
    err = float(np.max(np.abs(np.asarray(y) - np.asarray(y_ref))))
    # bf16 matmul operands (f32 accumulation, f32 residual): tolerance ~5e-3.
    assert np.allclose(np.asarray(y), np.asarray(y_ref), atol=5e-3, rtol=5e-3), err
    print("KERNEL_OK")
</pallas_src>

<mosaic_0001>
module attributes {stable_mosaic.version = 11 : i64} {
  func.func @kernel(%arg0: i32, %arg1: memref<8x384xf32, #tpu.memory_space<vmem>>, %arg2: memref<1x384xf32, #tpu.memory_space<vmem>>, %arg3: memref<8x1xf32, #tpu.memory_space<vmem>>, %arg4: memref<8x1xf32, #tpu.memory_space<vmem>>, %arg5: memref<8x8xbf16, #tpu.memory_space<vmem>>, %arg6: memref<8x1xf32, #tpu.memory_space<vmem>>, %arg7: memref<8x72xbf16, #tpu.memory_space<vmem>>, %arg8: memref<8x1xf32, #tpu.memory_space<vmem>>, %arg9: memref<8x8xbf16, #tpu.memory_space<vmem>>, %arg10: memref<8x1xf32, #tpu.memory_space<vmem>>, %arg11: memref<8x384xf32, #tpu.memory_space<vmem>>) attributes {dimension_semantics = [#tpu.dimension_semantics<parallel>], iteration_bounds = array<i64: 2>, scalar_prefetch = 0 : i64, scratch_operands = 0 : i64, tpu.core_type = #tpu.core_type<tc>, window_params = [{transform_indices = @transform_0, window_bounds = array<i64: 8, 384>}, {pipeline_mode = #tpu.pipeline_mode<synchronous>, transform_indices = @transform_1, window_bounds = array<i64: 1, 384>}, {pipeline_mode = #tpu.pipeline_mode<synchronous>, transform_indices = @transform_2, window_bounds = array<i64: 8, 1>}, {pipeline_mode = #tpu.pipeline_mode<synchronous>, transform_indices = @transform_3, window_bounds = array<i64: 8, 1>}, {pipeline_mode = #tpu.pipeline_mode<synchronous>, transform_indices = @transform_4, window_bounds = array<i64: 8, 8>}, {pipeline_mode = #tpu.pipeline_mode<synchronous>, transform_indices = @transform_5, window_bounds = array<i64: 8, 1>}, {pipeline_mode = #tpu.pipeline_mode<synchronous>, transform_indices = @transform_6, window_bounds = array<i64: 8, 72>}, {pipeline_mode = #tpu.pipeline_mode<synchronous>, transform_indices = @transform_7, window_bounds = array<i64: 8, 1>}, {pipeline_mode = #tpu.pipeline_mode<synchronous>, transform_indices = @transform_8, window_bounds = array<i64: 8, 8>}, {pipeline_mode = #tpu.pipeline_mode<synchronous>, transform_indices = @transform_9, window_bounds = array<i64: 8, 1>}, {transform_indices = @transform_10, window_bounds = array<i64: 8, 384>}]} {
    %c0 = arith.constant 0 : index
    %c0_0 = arith.constant 0 : index
    %0 = vector.load %arg1[%c0, %c0_0] : memref<8x384xf32, #tpu.memory_space<vmem>>, vector<8x384xf32>
    %c0_1 = arith.constant 0 : index
    %c0_2 = arith.constant 0 : index
    %1 = vector.load %arg3[%c0_1, %c0_2] : memref<8x1xf32, #tpu.memory_space<vmem>>, vector<8x1xf32>
    %2 = vector.broadcast %1 : vector<8x1xf32> to vector<8x384xf32>
    %3 = arith.mulf %0, %2 : vector<8x384xf32>
    %c0_3 = arith.constant 0 : index
    %c0_4 = arith.constant 0 : index
    %4 = vector.load %arg4[%c0_3, %c0_4] : memref<8x1xf32, #tpu.memory_space<vmem>>, vector<8x1xf32>
    %5 = vector.broadcast %4 : vector<8x1xf32> to vector<8x384xf32>
    %6 = arith.addf %3, %5 : vector<8x384xf32>
    %cst = arith.constant 0.000000e+00 : f32
    %7 = vector.broadcast %cst : f32 to vector<8x384xf32>
    %8 = arith.maximumf %6, %7 : vector<8x384xf32>
    %c0_5 = arith.constant 0 : index
    %c0_6 = arith.constant 0 : index
    %9 = vector.load %arg5[%c0_5, %c0_6] : memref<8x8xbf16, #tpu.memory_space<vmem>>, vector<8x8xbf16>
    %10 = arith.truncf %8 : vector<8x384xf32> to vector<8x384xbf16>
    %cst_7 = arith.constant dense<0.000000e+00> : vector<8x384xf32>
    %11 = tpu.matmul %9, %10, %cst_7 {dimension_numbers = #tpu.dot_dimension_numbers<[1], [0], [0], [1], [0, 0, 1, 1], [], []>} : vector<8x8xbf16>, vector<8x384xbf16>, vector<8x384xf32> -> vector<8x384xf32>
    %c0_8 = arith.constant 0 : index
    %c0_9 = arith.constant 0 : index
    %12 = vector.load %arg6[%c0_8, %c0_9] : memref<8x1xf32, #tpu.memory_space<vmem>>, vector<8x1xf32>
    %13 = vector.broadcast %12 : vector<8x1xf32> to vector<8x384xf32>
    %14 = arith.addf %11, %13 : vector<8x384xf32>
    %cst_10 = arith.constant 0.000000e+00 : f32
    %15 = vector.broadcast %cst_10 : f32 to vector<8x384xf32>
    %16 = arith.maximumf %14, %15 : vector<8x384xf32>
    %c0_11 = arith.constant 0 : index
    %c0_12 = arith.constant 0 : index
    %17 = vector.load %arg2[%c0_11, %c0_12] : memref<1x384xf32, #tpu.memory_space<vmem>>, vector<1x384xf32>
    %18 = vector.broadcast %17 : vector<1x384xf32> to vector<8x384xf32>
    %19 = arith.mulf %16, %18 : vector<8x384xf32>
    %c18_i32 = arith.constant 18 : i32
    %20 = tpu.dynamic_rotate %19 by %c18_i32 dim 1 : vector<8x384xf32>, i32 -> vector<8x384xf32>
    %c17_i32 = arith.constant 17 : i32
    %21 = tpu.dynamic_rotate %19 by %c17_i32 dim 1 : vector<8x384xf32>, i32 -> vector<8x384xf32>
    %c16_i32 = arith.constant 16 : i32
    %22 = tpu.dynamic_rotate %19 by %c16_i32 dim 1 : vector<8x384xf32>, i32 -> vector<8x384xf32>
    %c1_i32 = arith.constant 1 : i32
    %23 = tpu.dynamic_rotate %19 by %c1_i32 dim 1 : vector<8x384xf32>, i32 -> vector<8x384xf32>
    %c383_i32 = arith.constant 383 : i32
    %24 = tpu.dynamic_rotate %19 by %c383_i32 dim 1 : vector<8x384xf32>, i32 -> vector<8x384xf32>
    %c368_i32 = arith.constant 368 : i32
    %25 = tpu.dynamic_rotate %19 by %c368_i32 dim 1 : vector<8x384xf32>, i32 -> vector<8x384xf32>
    %c367_i32 = arith.constant 367 : i32
    %26 = tpu.dynamic_rotate %19 by %c367_i32 dim 1 : vector<8x384xf32>, i32 -> vector<8x384xf32>
    %c366_i32 = arith.constant 366 : i32
    %27 = tpu.dynamic_rotate %19 by %c366_i32 dim 1 : vector<8x384xf32>, i32 -> vector<8x384xf32>
    %28 = tpu.concatenate %20, %21, %22, %23, %19, %24, %25, %26, %27 in 0 : vector<8x384xf32>, vector<8x384xf32>, vector<8x384xf32>, vector<8x384xf32>, vector<8x384xf32>, vector<8x384xf32>, vector<8x384xf32>, vector<8x384xf32>, vector<8x384xf32> -> vector<72x384xf32>
    %c0_13 = arith.constant 0 : index
    %c0_14 = arith.constant 0 : index
    %29 = vector.load %arg7[%c0_13, %c0_14] : memref<8x72xbf16, #tpu.memory_space<vmem>>, vector<8x72xbf16>
    %30 = arith.truncf %28 : vector<72x384xf32> to vector<72x384xbf16>
    %cst_15 = arith.constant dense<0.000000e+00> : vector<8x384xf32>
    %31 = tpu.matmul %29, %30, %cst_15 {dimension_numbers = #tpu.dot_dimension_numbers<[1], [0], [0], [1], [0, 0, 1, 1], [], []>} : vector<8x72xbf16>, vector<72x384xbf16>, vector<8x384xf32> -> vector<8x384xf32>
    %c0_16 = arith.constant 0 : index
    %c0_17 = arith.constant 0 : index
    %32 = vector.load %arg8[%c0_16, %c0_17] : memref<8x1xf32, #tpu.memory_space<vmem>>, vector<8x1xf32>
    %33 = vector.broadcast %32 : vector<8x1xf32> to vector<8x384xf32>
    %34 = arith.addf %31, %33 : vector<8x384xf32>
    %cst_18 = arith.constant 0.000000e+00 : f32
    %35 = vector.broadcast %cst_18 : f32 to vector<8x384xf32>
    %36 = arith.maximumf %34, %35 : vector<8x384xf32>
    %c0_19 = arith.constant 0 : index
    %c0_20 = arith.constant 0 : index
    %37 = vector.load %arg9[%c0_19, %c0_20] : memref<8x8xbf16, #tpu.memory_space<vmem>>, vector<8x8xbf16>
    %38 = arith.truncf %36 : vector<8x384xf32> to vector<8x384xbf16>
    %cst_21 = arith.constant dense<0.000000e+00> : vector<8x384xf32>
    %39 = tpu.matmul %37, %38, %cst_21 {dimension_numbers = #tpu.dot_dimension_numbers<[1], [0], [0], [1], [0, 0, 1, 1], [], []>} : vector<8x8xbf16>, vector<8x384xbf16>, vector<8x384xf32> -> vector<8x384xf32>
    %c0_22 = arith.constant 0 : index
    %c0_23 = arith.constant 0 : index
    %40 = vector.load %arg10[%c0_22, %c0_23] : memref<8x1xf32, #tpu.memory_space<vmem>>, vector<8x1xf32>
    %41 = vector.broadcast %40 : vector<8x1xf32> to vector<8x384xf32>
    %42 = arith.addf %39, %41 : vector<8x384xf32>
    %c0_24 = arith.constant 0 : index
    %c0_25 = arith.constant 0 : index
    %43 = vector.load %arg1[%c0_24, %c0_25] : memref<8x384xf32, #tpu.memory_space<vmem>>, vector<8x384xf32>
    %44 = arith.addf %42, %43 : vector<8x384xf32>
    %c0_26 = arith.constant 0 : index
    %c0_27 = arith.constant 0 : index
    %45 = vector.load %arg11[%c0_26, %c0_27] : memref<8x384xf32, #tpu.memory_space<vmem>>, vector<8x384xf32>
    tpu.vector_store %arg11[%c0_26, %c0_27], %44 {strides = array<i32>} : memref<8x384xf32, #tpu.memory_space<vmem>>, vector<8x384xf32>,
    return
  }
  func.func @transform_0(%arg0: i32) -> (i32, i32) {
    %c0_i32 = arith.constant 0 : i32
    %c0_i32_0 = arith.constant 0 : i32
    return %c0_i32, %arg0 : i32, i32
  }
  func.func @transform_1(%arg0: i32) -> (i32, i32) {
    %c0_i32 = arith.constant 0 : i32
    %c0_i32_0 = arith.constant 0 : i32
    %c0_i32_1 = arith.constant 0 : i32
    return %c0_i32, %c0_i32_0 : i32, i32
  }
  func.func @transform_2(%arg0: i32) -> (i32, i32) {
    %c0_i32 = arith.constant 0 : i32
    %c0_i32_0 = arith.constant 0 : i32
    %c0_i32_1 = arith.constant 0 : i32
    return %c0_i32, %c0_i32_0 : i32, i32
  }
  func.func @transform_3(%arg0: i32) -> (i32, i32) {
    %c0_i32 = arith.constant 0 : i32
    %c0_i32_0 = arith.constant 0 : i32
    %c0_i32_1 = arith.constant 0 : i32
    return %c0_i32, %c0_i32_0 : i32, i32
  }
  func.func @transform_4(%arg0: i32) -> (i32, i32) {
    %c0_i32 = arith.constant 0 : i32
    %c0_i32_0 = arith.constant 0 : i32
    %c0_i32_1 = arith.constant 0 : i32
    return %c0_i32, %c0_i32_0 : i32, i32
  }
  func.func @transform_5(%arg0: i32) -> (i32, i32) {
    %c0_i32 = arith.constant 0 : i32
    %c0_i32_0 = arith.constant 0 : i32
    %c0_i32_1 = arith.constant 0 : i32
    return %c0_i32, %c0_i32_0 : i32, i32
  }
  func.func @transform_6(%arg0: i32) -> (i32, i32) {
    %c0_i32 = arith.constant 0 : i32
    %c0_i32_0 = arith.constant 0 : i32
    %c0_i32_1 = arith.constant 0 : i32
    return %c0_i32, %c0_i32_0 : i32, i32
  }
  func.func @transform_7(%arg0: i32) -> (i32, i32) {
    %c0_i32 = arith.constant 0 : i32
    %c0_i32_0 = arith.constant 0 : i32
    %c0_i32_1 = arith.constant 0 : i32
    return %c0_i32, %c0_i32_0 : i32, i32
  }
  func.func @transform_8(%arg0: i32) -> (i32, i32) {
    %c0_i32 = arith.constant 0 : i32
    %c0_i32_0 = arith.constant 0 : i32
    %c0_i32_1 = arith.constant 0 : i32
    return %c0_i32, %c0_i32_0 : i32, i32
  }
  func.func @transform_9(%arg0: i32) -> (i32, i32) {
    %c0_i32 = arith.constant 0 : i32
    %c0_i32_0 = arith.constant 0 : i32
    %c0_i32_1 = arith.constant 0 : i32
    return %c0_i32, %c0_i32_0 : i32, i32
  }
  func.func @transform_10(%arg0: i32) -> (i32, i32) {
    %c0_i32 = arith.constant 0 : i32
    %c0_i32_0 = arith.constant 0 : i32
    return %c0_i32, %arg0 : i32, i32
  }
}

</mosaic_0001>

<llo_original>
// kernel: tpu_custom_call.1
$region0: #{tpu_custom_call.1}
  #allocation0 [shape = 'u32[]', space=smem, size = 0x4, offset = 0x4, fixed_abs, tag = 'smem constant byte address 0x4 - core index']
  #allocation1 [shape = 'u32[144,128]{1,0:T(1,128)}', space=vmem, size = 0x12000, scoped, tag = 'internal scratch']
  %s0 = inlined_call_operand.hbm [shape: f32[8,768], index: 0, kind: input, shape index: {}]
  %s1 = inlined_call_operand.vmem [shape: f32[1,384], index: 1, kind: input, shape index: {}]
  %s2 = inlined_call_operand.vmem [shape: f32[8,1], index: 2, kind: input, shape index: {}]
  %s3 = inlined_call_operand.vmem [shape: f32[8,1], index: 3, kind: input, shape index: {}]
  %s4 = inlined_call_operand.vmem [shape: bf16[8,8], index: 4, kind: input, shape index: {}]
  %s5 = inlined_call_operand.vmem [shape: f32[8,1], index: 5, kind: input, shape index: {}]
  %s6 = inlined_call_operand.vmem [shape: bf16[8,72], index: 6, kind: input, shape index: {}]
  %s7 = inlined_call_operand.vmem [shape: f32[8,1], index: 7, kind: input, shape index: {}]
  %s8 = inlined_call_operand.vmem [shape: bf16[8,8], index: 8, kind: input, shape index: {}]
  %s9 = inlined_call_operand.vmem [shape: f32[8,1], index: 9, kind: input, shape index: {}]
  %s10 = inlined_call_operand.hbm [shape: f32[8,768], index: 10, kind: output, shape index: {}]
  %s11 = sld [smem:[#allocation0]]
  $region77: #{tpu_custom_call.1} parent=0
    _
  %s13 = ssub.s32 1, %s11
  %s14 = scalar_select 0, %s13, %s11
  $region1: #{tpu_custom_call.1} parent=0
    #allocation2 [shape = 'u8[24576]{0}', space=vmem, size = 0x6000, scoped, tag = 'input window, operand 0']
    #allocation3 [shape = 's32[2]{0}', space=sflag, size = 0x8, scoped, tag = 'scoped memory for tpu_custom_call.1']
    #allocation4 [shape = 's32[2]{0}', space=sflag, size = 0x8, scoped, tag = 'scoped memory for tpu_custom_call.1']
    #allocation5 [shape = 'u8[24576]{0}', space=vmem, size = 0x6000, scoped, tag = 'output window, operand 0']
    %15 = vsyncpa [#allocation3], 0
    %s16 = scalar_lea.sflag [#allocation3], 1
    %17 = vsyncpa %s16, 0
    %18 = vsyncpa [#allocation4], 0
    %s19 = scalar_lea.sflag [#allocation4], 1
    %20 = vsyncpa %s19, 0
    loop: start=0, step=1, limit=4
    $region2: #{tpu_custom_call.1} parent=1 // loop_pre_header
      _
    $region3: #{tpu_custom_call.1} parent=1 // loop_header
      %s22 = sphi 0, %s26
      %p23 = scmp.ge.s32.totalorder %s22, 4
      %s32 = sphi 0, %s34
      %s35 = sphi 0, %s32
      %s36 = sphi 0, %s35
      %s52 = sphi 0, %s36
      %s56 = sphi 0, %s56
      %s58 = sphi 0, %s56
      %s59 = sphi 0, %s58
      %s73 = sphi 0, %s59
      %s77 = sphi 0, %s77
      %s79 = sphi 0, %s77
      %s80 = sphi 0, %s79
      %s94 = sphi 0, %s80
      %s98 = sphi 0, %s98
      %s100 = sphi 0, %s98
      %s101 = sphi 0, %s100
      %s115 = sphi 0, %s101
      %s119 = sphi 0, %s119
      %s121 = sphi 0, %s119
      %s122 = sphi 0, %s121
      %s136 = sphi 0, %s122
      %s140 = sphi 0, %s140
      %s142 = sphi 0, %s140
      %s143 = sphi 0, %s142
      %s157 = sphi 0, %s143
      %s161 = sphi 0, %s161
      %s163 = sphi 0, %s161
      %s164 = sphi 0, %s163
      %s178 = sphi 0, %s164
      %s182 = sphi 0, %s182
      %s184 = sphi 0, %s182
      %s185 = sphi 0, %s184
      %s199 = sphi 0, %s185
      %s203 = sphi 0, %s203
      %s205 = sphi 0, %s203
      %s206 = sphi 0, %s205
      %s220 = sphi 0, %s206
      %s224 = sphi 0, %s224
      %s226 = sphi 0, %s224
      %s227 = sphi 0, %s226
      %s241 = sphi 0, %s227
      %s247 = sphi 0, %s249
      %s250 = sphi 0, %s247
      %s251 = sphi 0, %s250
      %s267 = sphi 0, %s251
    $region4: #{tpu_custom_call.1} parent=1 // loop_header_branch
      %25 = sbr.rel (%p23) target = $region8
    $region5: #{tpu_custom_call.1} parent=1 // loop_body
      %s27 = ssub.s32 %s22, 1
      %s28 = ssub.s32 %s22, 2
      %s29 = sadd.s32 %s22, 1
      %s30 = ssub.s32 %s22, %s29
      %p31 = scmp.eq.s32.totalorder %s30, 0
      %s33 = sadd.s32 %s32, 1
      %s34 = scalar_select %p31, %s32, %s33
      %p37 = pneg %p31
      %p38 = scmp.eq.s32.totalorder %s22, 1
      %p39 = por %p37, %p38
      %p40 = scmp.ne.s32.totalorder %s32, %s35
      %p41 = scmp.eq.s32.totalorder %s22, 0
      %p42 = por %p40, %p41
      %p43 = scmp.ne.s32.totalorder %s32, %s35
      %p44 = scmp.eq.s32.totalorder %s27, 1
      %p45 = por %p43, %p44
      %p46 = scmp.ne.s32.totalorder %s35, %s36
      %p47 = scmp.eq.s32.totalorder %s27, 0
      %p48 = por %p46, %p47
      %p49 = scmp.ne.s32.totalorder %s35, %s36
      %p50 = scmp.eq.s32.totalorder %s28, 1
      %p51 = por %p49, %p50
      %p53 = scmp.ne.s32.totalorder %s36, %s52
      %p54 = scmp.eq.s32.totalorder %s28, 0
      %p55 = por %p53, %p54
      %s57 = sadd.s32 %s56, 1
      %p60 = scmp.eq.s32.totalorder %s22, 1
      %p61 = scmp.ne.s32.totalorder %s56, %s58
      %p62 = scmp.eq.s32.totalorder %s22, 0
      %p63 = por %p61, %p62
      %p64 = scmp.ne.s32.totalorder %s56, %s58
      %p65 = scmp.eq.s32.totalorder %s27, 1
      %p66 = por %p64, %p65
      %p67 = scmp.ne.s32.totalorder %s58, %s59
      %p68 = scmp.eq.s32.totalorder %s27, 0
      %p69 = por %p67, %p68
      %p70 = scmp.ne.s32.totalorder %s58, %s59
      %p71 = scmp.eq.s32.totalorder %s28, 1
      %p72 = por %p70, %p71
      %p74 = scmp.ne.s32.totalorder %s59, %s73
      %p75 = scmp.eq.s32.totalorder %s28, 0
      %p76 = por %p74, %p75
      %s78 = sadd.s32 %s77, 1
      %p81 = scmp.eq.s32.totalorder %s22, 1
      %p82 = scmp.ne.s32.totalorder %s77, %s79
      %p83 = scmp.eq.s32.totalorder %s22, 0
      %p84 = por %p82, %p83
      %p85 = scmp.ne.s32.totalorder %s77, %s79
      %p86 = scmp.eq.s32.totalorder %s27, 1
      %p87 = por %p85, %p86
      %p88 = scmp.ne.s32.totalorder %s79, %s80
      %p89 = scmp.eq.s32.totalorder %s27, 0
      %p90 = por %p88, %p89
      %p91 = scmp.ne.s32.totalorder %s79, %s80
      %p92 = scmp.eq.s32.totalorder %s28, 1
      %p93 = por %p91, %p92
      %p95 = scmp.ne.s32.totalorder %s80, %s94
      %p96 = scmp.eq.s32.totalorder %s28, 0
      %p97 = por %p95, %p96
      %s99 = sadd.s32 %s98, 1
      %p102 = scmp.eq.s32.totalorder %s22, 1
      %p103 = scmp.ne.s32.totalorder %s98, %s100
      %p104 = scmp.eq.s32.totalorder %s22, 0
      %p105 = por %p103, %p104
      %p106 = scmp.ne.s32.totalorder %s98, %s100
      %p107 = scmp.eq.s32.totalorder %s27, 1
      %p108 = por %p106, %p107
      %p109 = scmp.ne.s32.totalorder %s100, %s101
      %p110 = scmp.eq.s32.totalorder %s27, 0
      %p111 = por %p109, %p110
      %p112 = scmp.ne.s32.totalorder %s100, %s101
      %p113 = scmp.eq.s32.totalorder %s28, 1
      %p114 = por %p112, %p113
      %p116 = scmp.ne.s32.totalorder %s101, %s115
      %p117 = scmp.eq.s32.totalorder %s28, 0
      %p118 = por %p116, %p117
      %s120 = sadd.s32 %s119, 1
      %p123 = scmp.eq.s32.totalorder %s22, 1
      %p124 = scmp.ne.s32.totalorder %s119, %s121
      %p125 = scmp.eq.s32.totalorder %s22, 0
      %p126 = por %p124, %p125
      %p127 = scmp.ne.s32.totalorder %s119, %s121
      %p128 = scmp.eq.s32.totalorder %s27, 1
      %p129 = por %p127, %p128
      %p130 = scmp.ne.s32.totalorder %s121, %s122
      %p131 = scmp.eq.s32.totalorder %s27, 0
      %p132 = por %p130, %p131
      %p133 = scmp.ne.s32.totalorder %s121, %s122
      %p134 = scmp.eq.s32.totalorder %s28, 1
      %p135 = por %p133, %p134
      %p137 = scmp.ne.s32.totalorder %s122, %s136
      %p138 = scmp.eq.s32.totalorder %s28, 0
      %p139 = por %p137, %p138
      %s141 = sadd.s32 %s140, 1
      %p144 = scmp.eq.s32.totalorder %s22, 1
      %p145 = scmp.ne.s32.totalorder %s140, %s142
      %p146 = scmp.eq.s32.totalorder %s22, 0
      %p147 = por %p145, %p146
      %p148 = scmp.ne.s32.totalorder %s140, %s142
      %p149 = scmp.eq.s32.totalorder %s27, 1
      %p150 = por %p148, %p149
      %p151 = scmp.ne.s32.totalorder %s142, %s143
      %p152 = scmp.eq.s32.totalorder %s27, 0
      %p153 = por %p151, %p152
      %p154 = scmp.ne.s32.totalorder %s142, %s143
      %p155 = scmp.eq.s32.totalorder %s28, 1
      %p156 = por %p154, %p155
      %p158 = scmp.ne.s32.totalorder %s143, %s157
      %p159 = scmp.eq.s32.totalorder %s28, 0
      %p160 = por %p158, %p159
      %s162 = sadd.s32 %s161, 1
      %p165 = scmp.eq.s32.totalorder %s22, 1
      %p166 = scmp.ne.s32.totalorder %s161, %s163
      %p167 = scmp.eq.s32.totalorder %s22, 0
      %p168 = por %p166, %p167
      %p169 = scmp.ne.s32.totalorder %s161, %s163
      %p170 = scmp.eq.s32.totalorder %s27, 1
      %p171 = por %p169, %p170
      %p172 = scmp.ne.s32.totalorder %s163, %s164
      %p173 = scmp.eq.s32.totalorder %s27, 0
      %p174 = por %p172, %p173
      %p175 = scmp.ne.s32.totalorder %s163, %s164
      %p176 = scmp.eq.s32.totalorder %s28, 1
      %p177 = por %p175, %p176
      %p179 = scmp.ne.s32.totalorder %s164, %s178
      %p180 = scmp.eq.s32.totalorder %s28, 0
      %p181 = por %p179, %p180
      %s183 = sadd.s32 %s182, 1
      %p186 = scmp.eq.s32.totalorder %s22, 1
      %p187 = scmp.ne.s32.totalorder %s182, %s184
      %p188 = scmp.eq.s32.totalorder %s22, 0
      %p189 = por %p187, %p188
      %p190 = scmp.ne.s32.totalorder %s182, %s184
      %p191 = scmp.eq.s32.totalorder %s27, 1
      %p192 = por %p190, %p191
      %p193 = scmp.ne.s32.totalorder %s184, %s185
      %p194 = scmp.eq.s32.totalorder %s27, 0
      %p195 = por %p193, %p194
      %p196 = scmp.ne.s32.totalorder %s184, %s185
      %p197 = scmp.eq.s32.totalorder %s28, 1
      %p198 = por %p196, %p197
      %p200 = scmp.ne.s32.totalorder %s185, %s199
      %p201 = scmp.eq.s32.totalorder %s28, 0
      %p202 = por %p200, %p201
      %s204 = sadd.s32 %s203, 1
      %p207 = scmp.eq.s32.totalorder %s22, 1
      %p208 = scmp.ne.s32.totalorder %s203, %s205
      %p209 = scmp.eq.s32.totalorder %s22, 0
      %p210 = por %p208, %p209
      %p211 = scmp.ne.s32.totalorder %s203, %s205
      %p212 = scmp.eq.s32.totalorder %s27, 1
      %p213 = por %p211, %p212
      %p214 = scmp.ne.s32.totalorder %s205, %s206
      %p215 = scmp.eq.s32.totalorder %s27, 0
      %p216 = por %p214, %p215
      %p217 = scmp.ne.s32.totalorder %s205, %s206
      %p218 = scmp.eq.s32.totalorder %s28, 1
      %p219 = por %p217, %p218
      %p221 = scmp.ne.s32.totalorder %s206, %s220
      %p222 = scmp.eq.s32.totalorder %s28, 0
      %p223 = por %p221, %p222
      %s225 = sadd.s32 %s224, 1
      %p228 = scmp.eq.s32.totalorder %s22, 1
      %p229 = scmp.ne.s32.totalorder %s224, %s226
      %p230 = scmp.eq.s32.totalorder %s22, 0
      %p231 = por %p229, %p230
      %p232 = scmp.ne.s32.totalorder %s224, %s226
      %p233 = scmp.eq.s32.totalorder %s27, 1
      %p234 = por %p232, %p233
      %p235 = scmp.ne.s32.totalorder %s226, %s227
      %p236 = scmp.eq.s32.totalorder %s27, 0
      %p237 = por %p235, %p236
      %p238 = scmp.ne.s32.totalorder %s226, %s227
      %p239 = scmp.eq.s32.totalorder %s28, 1
      %p240 = por %p238, %p239
      %p242 = scmp.ne.s32.totalorder %s227, %s241
      %p243 = scmp.eq.s32.totalorder %s28, 0
      %p244 = por %p242, %p243
      %s245 = ssub.s32 %s22, %s29
      %p246 = scmp.eq.s32.totalorder %s245, 0
      %s248 = sadd.s32 %s247, 1
      %s249 = scalar_select %p246, %s247, %s248
      %p252 = pneg %p246
      %p253 = scmp.eq.s32.totalorder %s22, 1
      %p254 = por %p252, %p253
      %p255 = scmp.ne.s32.totalorder %s247, %s250
      %p256 = scmp.eq.s32.totalorder %s22, 0
      %p257 = por %p255, %p256
      %p258 = scmp.ne.s32.totalorder %s247, %s250
      %p259 = scmp.eq.s32.totalorder %s27, 1
      %p260 = por %p258, %p259
      %p261 = scmp.ne.s32.totalorder %s250, %s251
      %p262 = scmp.eq.s32.totalorder %s27, 0
      %p263 = por %p261, %p262
      %p264 = scmp.ne.s32.totalorder %s250, %s251
      %p265 = scmp.eq.s32.totalorder %s28, 1
      %p266 = por %p264, %p265
      %p268 = scmp.ne.s32.totalorder %s251, %s267
      %p269 = scmp.eq.s32.totalorder %s28, 0
      %p270 = por %p268, %p269
      %p271 = scmp.le.s32.totalorder 1, %s22
      %p272 = scmp.lt.s32.totalorder %s22, 3
      %p273 = pnand %p271, %p272
      %p274 = pneg %p273
      // Predicated region
      $region9: #{tpu_custom_call.1} parent=5 // pred_check
        _
      $region10: #{tpu_custom_call.1} parent=5 // pred_check_branch
        %276 = sbr.rel (%p273) target = $region12
      $region11: #{tpu_custom_call.1} parent=5 // pred_region
        %s277 = ssub.s32 %s22, 1
        // Predicated region
        $region13: #{tpu_custom_call.1} parent=11 // pred_check
          %p278 = pneg %p69
        $region14: #{tpu_custom_call.1} parent=11 // pred_check_branch
          %280 = sbr.rel (%p278) target = $region16
        $region15: #{tpu_custom_call.1} parent=11 // pred_region
          _
        $region16: #{tpu_custom_call.1} parent=11 // pred_fallthru
          _
        // Predicated region
        $region17: #{tpu_custom_call.1} parent=11 // pred_check
          %p281 = pneg %p90
        $region18: #{tpu_custom_call.1} parent=11 // pred_check_branch
          %283 = sbr.rel (%p281) target = $region20
        $region19: #{tpu_custom_call.1} parent=11 // pred_region
          _
        $region20: #{tpu_custom_call.1} parent=11 // pred_fallthru
          _
        // Predicated region
        $region21: #{tpu_custom_call.1} parent=11 // pred_check
          %p284 = pneg %p111
        $region22: #{tpu_custom_call.1} parent=11 // pred_check_branch
          %286 = sbr.rel (%p284) target = $region24
        $region23: #{tpu_custom_call.1} parent=11 // pred_region
          _
        $region24: #{tpu_custom_call.1} parent=11 // pred_fallthru
          _
        // Predicated region
        $region25: #{tpu_custom_call.1} parent=11 // pred_check
          %p287 = pneg %p132
        $region26: #{tpu_custom_call.1} parent=11 // pred_check_branch
          %289 = sbr.rel (%p287) target = $region28
        $region27: #{tpu_custom_call.1} parent=11 // pred_region
          _
        $region28: #{tpu_custom_call.1} parent=11 // pred_fallthru
          _
        // Predicated region
        $region29: #{tpu_custom_call.1} parent=11 // pred_check
          %p290 = pneg %p153
        $region30: #{tpu_custom_call.1} parent=11 // pred_check_branch
          %292 = sbr.rel (%p290) target = $region32
        $region31: #{tpu_custom_call.1} parent=11 // pred_region
          _
        $region32: #{tpu_custom_call.1} parent=11 // pred_fallthru
          _
        // Predicated region
        $region33: #{tpu_custom_call.1} parent=11 // pred_check
          %p293 = pneg %p174
        $region34: #{tpu_custom_call.1} parent=11 // pred_check_branch
          %295 = sbr.rel (%p293) target = $region36
        $region35: #{tpu_custom_call.1} parent=11 // pred_region
          _
        $region36: #{tpu_custom_call.1} parent=11 // pred_fallthru
          _
        // Predicated region
        $region37: #{tpu_custom_call.1} parent=11 // pred_check
          %p296 = pneg %p195
        $region38: #{tpu_custom_call.1} parent=11 // pred_check_branch
          %298 = sbr.rel (%p296) target = $region40
        $region39: #{tpu_custom_call.1} parent=11 // pred_region
          _
        $region40: #{tpu_custom_call.1} parent=11 // pred_fallthru
          _
        // Predicated region
        $region41: #{tpu_custom_call.1} parent=11 // pred_check
          %p299 = pneg %p216
        $region42: #{tpu_custom_call.1} parent=11 // pred_check_branch
          %301 = sbr.rel (%p299) target = $region44
        $region43: #{tpu_custom_call.1} parent=11 // pred_region
          _
        $region44: #{tpu_custom_call.1} parent=11 // pred_fallthru
          _
        // Predicated region
        $region45: #{tpu_custom_call.1} parent=11 // pred_check
          %p302 = pneg %p237
        $region46: #{tpu_custom_call.1} parent=11 // pred_check_branch
          %304 = sbr.rel (%p302) target = $region48
        $region47: #{tpu_custom_call.1} parent=11 // pred_region
          _
        $region48: #{tpu_custom_call.1} parent=11 // pred_fallthru
          _
      $region12: #{tpu_custom_call.1} parent=5 // pred_fallthru
        _
      %p305 = scmp.lt.s32.totalorder %s22, 2
      // Predicated region
      $region49: #{tpu_custom_call.1} parent=5 // pred_check
        %p306 = pneg %p305
      $region50: #{tpu_custom_call.1} parent=5 // pred_check_branch
        %308 = sbr.rel (%p306) target = $region52
      $region51: #{tpu_custom_call.1} parent=5 // pred_region
        // Predicated region
        $region53: #{tpu_custom_call.1} parent=51 // pred_check
          %p309 = pneg %p42
        $region54: #{tpu_custom_call.1} parent=51 // pred_check_branch
          %311 = sbr.rel (%p309) target = $region56
        $region55: #{tpu_custom_call.1} parent=51 // pred_region
          %s312 = sand.u32 %s32, 1
          %s313 = scalar_lea.sflag [#allocation3], %s312
          %s314 = sand.u32 %s32, 1
          %s315 = smul.addr %s314, 24
          %s316 = scalar_lea.vmem [#allocation2], %s315
          %s317 = smul.u32 3, %s22
          %s319 = ssub.s32 384, 384
          %320 = vsyncadd %s313, %s319
          %s321 = smul.addr %s317, 128
          %s322 = scalar_lea.hbm %s0, %s321
          %s324 = sshll.u32 %s316, 4
          %s325 = int_to_ptr.vmem [resolvable:$true] %s324
          %327 = dma.hbm_to_vmem [thread:$0]  %s322, 384, %s325, %s313
        $region56: #{tpu_custom_call.1} parent=51 // pred_fallthru
          _
      $region52: #{tpu_custom_call.1} parent=5 // pred_fallthru
        _
      %p328 = scmp.le.s32.totalorder 1, %s22
      %p329 = scmp.lt.s32.totalorder %s22, 3
      %p330 = pnand %p328, %p329
      %p331 = pneg %p330
      // Predicated region
      $region57: #{tpu_custom_call.1} parent=5 // pred_check
        _
      $region58: #{tpu_custom_call.1} parent=5 // pred_check_branch
        %333 = sbr.rel (%p330) target = $region60
      $region59: #{tpu_custom_call.1} parent=5 // pred_region
        %s334 = ssub.s32 %s22, 1
        %s335 = sand.u32 %s35, 1
        %s336 = scalar_lea.sflag [#allocation3], %s335
        %s337 = sand.u32 %s35, 1
        %s338 = smul.addr %s337, 24
        %s339 = scalar_lea.vmem [#allocation2], %s338
        // Predicated region
        $region61: #{tpu_custom_call.1} parent=59 // pred_check
          %p340 = pneg %p48
        $region62: #{tpu_custom_call.1} parent=59 // pred_check_branch
          %342 = sbr.rel (%p340) target = $region64
        $region63: #{tpu_custom_call.1} parent=59 // pred_region
          %343 = dma.done %s336, 384
        $region64: #{tpu_custom_call.1} parent=59 // pred_fallthru
          _
        %s344 = sand.u32 %s35, 1
        %s345 = scalar_lea.sflag [#allocation3], %s344
        %s346 = sand.u32 %s35, 1
        %s347 = smul.addr %s346, 24
        %s348 = scalar_lea.vmem [#allocation2], %s347
        %p349 = pneg %p48
        %p350 = pneg %p45
        %p351 = pneg %p69
        %p352 = pneg %p66
        %p353 = pneg %p90
        %p354 = pneg %p87
        %p355 = pneg %p111
        %p356 = pneg %p108
        %p357 = pneg %p132
        %p358 = pneg %p129
        %p359 = pneg %p153
        %p360 = pneg %p150
        %p361 = pneg %p174
        %p362 = pneg %p171
        %p363 = pneg %p195
        %p364 = pneg %p192
        %p365 = pneg %p216
        %p366 = pneg %p213
        %p367 = pneg %p237
        %p368 = pneg %p234
        %p369 = pneg %p263
        %p370 = pneg %p260
        %s371 = sand.u32 %s250, 1
        %s372 = scalar_lea.sflag [#allocation4], %s371
        %s373 = sand.u32 %s250, 1
        %s374 = smul.addr %s373, 24
        %s375 = scalar_lea.vmem [#allocation5], %s374
        %s376 = smul.u32 3, %s27
        %s377 = smul.u32 3, %s27
        %v379 = vld [vmem:[%s339] sm:$0xff]
        %v380 = vld [vmem:[%s339 + $0x8] sm:$0xff]
        %v381 = vld [vmem:[%s339 + $0x10] sm:$0xff]
        %v382 = vld [vmem:[%s2] sm:$0xff]
        %384 = vset.pattern.permute.xlu0 0
        %385 = vperm.xlu0 %384, %v382
        %v386 = vpop.permute.xlu0 %385
        %v388 = vmul.f32 %v379, %v386
        %v389 = vmul.f32 %v380, %v386
        %v390 = vmul.f32 %v381, %v386
        %v391 = vld [vmem:[%s3] sm:$0xff]
        %393 = vset.pattern.permute.xlu0 0
        %394 = vperm.xlu0 %393, %v391
        %v395 = vpop.permute.xlu0 %394
        %v397 = vadd.f32 %v388, %v395
        %v398 = vadd.f32 %v389, %v395
        %v399 = vadd.f32 %v390, %v395
        %v400 = vmax.f32 %v397, 0.0
        %v401 = vmax.f32 %v398, 0.0
        %v402 = vmax.f32 %v399, 0.0
        %v403 = vld [vmem:[%s4] sm:$0xf]
        %v404 = vpack.c.bf16 %v400, %v400
        %v405 = vpack.c.bf16 %v401, %v401
        %v406 = vpack.c.bf16 %v402, %v402
        %v407 = vld [vmem:[%s5] sm:$0xff]
        %409 = vset.pattern.permute.xlu0 0
        %410 = vperm.xlu0 %409, %v407
        %v411 = vpop.permute.xlu0 %410
        %vm413 = vcmask 64512
        %v415 = vsel %vm413, %v403, 0
        %vm417 = vcmask 1043456
        %v419 = vsel %vm417, %v404, 0
        %v422 = vsel %vm417, %v405, 0
        %v425 = vsel %vm417, %v406, 0
        %427 = vmatprep.subr.bf16.mxu0 %v422
        %428 = vmatpush1.bf16.msra.mxu0 %v419
        %429 = vmatprep.subr.bf16.mxu0 0
        %430 = vmatpush1.bf16.msra.mxu0 0
        %431 = vmatprep.subr.bf16.mxu0 0
        %432 = vmatpush1.bf16.msra.mxu0 0
        %433 = vmatprep.subr.bf16.mxu0 0
        %434 = vmatpush1.bf16.msra.mxu0 0
        %435 = vmatprep.subr.bf16.mxu0 0
        %436 = vmatpush1.bf16.msra.mxu0 0
        %437 = vmatprep.subr.bf16.mxu0 0
        %438 = vmatpush1.bf16.msra.mxu0 0
        %439 = vmatprep.subr.bf16.mxu0 0
        %440 = vmatpush1.bf16.msra.mxu0 0
        %441 = vmatprep.subr.bf16.mxu0 0
        %442 = vmatpush1.bf16.msra.mxu0 0
        %443 = vmatprep.subr.bf16.mxu0 0
        %444 = vmatpush1.bf16.msra.mxu0 0
        %445 = vmatprep.subr.bf16.mxu0 0
        %446 = vmatpush1.bf16.msra.mxu0 0
        %447 = vmatprep.subr.bf16.mxu0 0
        %448 = vmatpush1.bf16.msra.mxu0 0
        %449 = vmatprep.subr.bf16.mxu0 0
        %450 = vmatpush1.bf16.msra.mxu0 0
        %451 = vmatprep.subr.bf16.mxu0 0
        %452 = vmatpush1.bf16.msra.mxu0 0
        %453 = vmatprep.subr.bf16.mxu0 0
        %454 = vmatpush1.bf16.msra.mxu0 0
        %455 = vmatprep.subr.bf16.mxu0 0
        %456 = vmatpush1.bf16.msra.mxu0 0
        %457 = vmatprep.subr.bf16.mxu0 0
        %458 = vmatpush1.bf16.msra.mxu0 0
        %459 = vmatprep.mubr.bf16.mxu0 0
        %460 = vmatmul.mubr.bf16.gmra.mrb[0].mxu0 %v415
        %v461 = vpop.f32.mrb[0].mxu0
        %v462 = vadd.f32 %v411, %v461
        %v463 = vpop.f32.mrb[0].mxu0
        %v464 = vadd.f32 %v411, %v463
        %v465 = vpop.f32.mrb[0].mxu0
        %v466 = vpop.f32.mrb[0].mxu0
        %467 = vdwg.mxu0
        %468 = vmatprep.subr.bf16.mxu0 0
        %469 = vmatpush1.bf16.msra.mxu0 %v425
        %470 = vmatprep.subr.bf16.mxu0 0
        %471 = vmatpush1.bf16.msra.mxu0 0
        %472 = vmatprep.subr.bf16.mxu0 0
        %473 = vmatpush1.bf16.msra.mxu0 0
        %474 = vmatprep.subr.bf16.mxu0 0
        %475 = vmatpush1.bf16.msra.mxu0 0
        %476 = vmatprep.subr.bf16.mxu0 0
        %477 = vmatpush1.bf16.msra.mxu0 0
        %478 = vmatprep.subr.bf16.mxu0 0
        %479 = vmatpush1.bf16.msra.mxu0 0
        %480 = vmatprep.subr.bf16.mxu0 0
        %481 = vmatpush1.bf16.msra.mxu0 0
        %482 = vmatprep.subr.bf16.mxu0 0
        %483 = vmatpush1.bf16.msra.mxu0 0
        %484 = vmatprep.subr.bf16.mxu0 0
        %485 = vmatpush1.bf16.msra.mxu0 0
        %486 = vmatprep.subr.bf16.mxu0 0
        %487 = vmatpush1.bf16.msra.mxu0 0
        %488 = vmatprep.subr.bf16.mxu0 0
        %489 = vmatpush1.bf16.msra.mxu0 0
        %490 = vmatprep.subr.bf16.mxu0 0
        %491 = vmatpush1.bf16.msra.mxu0 0
        %492 = vmatprep.subr.bf16.mxu0 0
        %493 = vmatpush1.bf16.msra.mxu0 0
        %494 = vmatprep.subr.bf16.mxu0 0
        %495 = vmatpush1.bf16.msra.mxu0 0
        %496 = vmatprep.subr.bf16.mxu0 0
        %497 = vmatpush1.bf16.msra.mxu0 0
        %498 = vmatprep.subr.bf16.mxu0 0
        %499 = vmatpush1.bf16.msra.mxu0 0
        %500 = vmatprep.mubr.bf16.mxu0 0
        %501 = vmatmul.mubr.bf16.gmra.mrb[0].mxu0 %v415
        %v502 = vpop.f32.mrb[0].mxu0
        %v503 = vadd.f32 %v411, %v502
        %v504 = vpop.f32.mrb[0].mxu0
        %v505 = vpop.f32.mrb[0].mxu0
        %v506 = vpop.f32.mrb[0].mxu0
        %507 = vdwg.mxu0
        %v508 = vmax.f32 %v462, 0.0
        %v509 = vmax.f32 %v464, 0.0
        %v510 = vmax.f32 %v503, 0.0
        %v511 = vld [vmem:[%s1] sm:$0x7]
        %v513 = vlaneseq
        %v514 = vshrl.u32 %v513, 7
        %v515 = vsub.s32 0, %v514
        %v516 = vrot.slane %v511, %v515
        %v517 = vlaneseq
        %v518 = vshrl.u32 %v517, 7
        %v519 = vsub.s32 1, %v518
        %v520 = vrot.slane %v511, %v519
        %v521 = vlaneseq
        %v522 = vshrl.u32 %v521, 7
        %v523 = vsub.s32 2, %v522
        %v524 = vrot.slane %v511, %v523
        %v528 = vmul.f32 %v508, %v516
        %v529 = vmul.f32 %v509, %v520
        %v530 = vmul.f32 %v510, %v524
        %531 = vrot.lane.b32.xlu0 %v528, 18
        %v532 = vpop.permute.xlu0 %531
        %533 = vrot.lane.b32.xlu0 %v529, 18
        %v534 = vpop.permute.xlu0 %533
        %535 = vrot.lane.b32.xlu0 %v530, 18
        %v536 = vpop.permute.xlu0 %535
        %v537 = vlaneseq
        %v538 = vand.u32 %v537, 127
        %vm539 = vcmp.lt.s32.totalorder %v538, 18
        %v540 = vsel %vm539, %v534, %v536
        %v541 = vsel %vm539, %v532, %v534
        %v542 = vsel %vm539, %v536, %v532
        %543 = vrot.lane.b32.xlu0 %v528, 17
        %v544 = vpop.permute.xlu0 %543
        %545 = vrot.lane.b32.xlu0 %v529, 17
        %v546 = vpop.permute.xlu0 %545
        %547 = vrot.lane.b32.xlu0 %v530, 17
        %v548 = vpop.permute.xlu0 %547
        %vm549 = vcmp.lt.s32.totalorder %v538, 17
        %v550 = vsel %vm549, %v546, %v548
        %v551 = vsel %vm549, %v544, %v546
        %v552 = vsel %vm549, %v548, %v544
        %553 = vrot.lane.b32.xlu0 %v528, 16
        %v554 = vpop.permute.xlu0 %553
        %555 = vrot.lane.b32.xlu0 %v529, 16
        %v556 = vpop.permute.xlu0 %555
        %557 = vrot.lane.b32.xlu0 %v530, 16
        %v558 = vpop.permute.xlu0 %557
        %vm559 = vcmp.lt.s32.totalorder %v538, 16
        %v560 = vsel %vm559, %v556, %v558
        %v561 = vsel %vm559, %v554, %v556
        %v562 = vsel %vm559, %v558, %v554
        %563 = vrot.lane.b32.xlu0 %v528, 1
        %v564 = vpop.permute.xlu0 %563
        %565 = vrot.lane.b32.xlu0 %v529, 1
        %v566 = vpop.permute.xlu0 %565
        %567 = vrot.lane.b32.xlu0 %v530, 1
        %v568 = vpop.permute.xlu0 %567
        %vm569 = vcmp.lt.s32.totalorder %v538, 1
        %v570 = vsel %vm569, %v566, %v568
        %v571 = vsel %vm569, %v564, %v566
        %v572 = vsel %vm569, %v568, %v564
        %573 = vrot.lane.b32.xlu0 %v528, 127
        %v574 = vpop.permute.xlu0 %573
        %575 = vrot.lane.b32.xlu0 %v529, 127
        %v576 = vpop.permute.xlu0 %575
        %577 = vrot.lane.b32.xlu0 %v530, 127
        %v578 = vpop.permute.xlu0 %577
        %vm579 = vcmp.lt.s32.totalorder %v538, 127
        %v580 = vsel %vm579, %v576, %v578
        %v581 = vsel %vm579, %v574, %v576
        %v582 = vsel %vm579, %v578, %v574
        %583 = vrot.lane.b32.xlu0 %v528, 112
        %v584 = vpop.permute.xlu0 %583
        %585 = vrot.lane.b32.xlu0 %v529, 112
        %v586 = vpop.permute.xlu0 %585
        %587 = vrot.lane.b32.xlu0 %v530, 112
        %v588 = vpop.permute.xlu0 %587
        %vm589 = vcmp.lt.s32.totalorder %v538, 112
        %v590 = vsel %vm589, %v586, %v588
        %v591 = vsel %vm589, %v584, %v586
        %v592 = vsel %vm589, %v588, %v584
        %593 = vrot.lane.b32.xlu0 %v528, 111
        %v594 = vpop.permute.xlu0 %593
        %595 = vrot.lane.b32.xlu0 %v529, 111
        %v596 = vpop.permute.xlu0 %595
        %597 = vrot.lane.b32.xlu0 %v530, 111
        %v598 = vpop.permute.xlu0 %597
        %vm599 = vcmp.lt.s32.totalorder %v538, 111
        %v600 = vsel %vm599, %v596, %v598
        %v601 = vsel %vm599, %v594, %v596
        %v602 = vsel %vm599, %v598, %v594
        %603 = vrot.lane.b32.xlu0 %v528, 110
        %v604 = vpop.permute.xlu0 %603
        %605 = vrot.lane.b32.xlu0 %v529, 110
        %v606 = vpop.permute.xlu0 %605
        %607 = vrot.lane.b32.xlu0 %v530, 110
        %v608 = vpop.permute.xlu0 %607
        %vm609 = vcmp.lt.s32.totalorder %v538, 110
        %v610 = vsel %vm609, %v606, %v608
        %v611 = vsel %vm609, %v604, %v606
        %v612 = vsel %vm609, %v608, %v604
        %v613 = vld [vmem:[%s6] sm:$0xf]
        %v614 = vpack.c.bf16 %v552, %v542
        %v615 = vpack.c.bf16 %v551, %v541
        %v616 = vpack.c.bf16 %v550, %v540
        %v617 = vpack.c.bf16 %v572, %v562
        %v618 = vpack.c.bf16 %v571, %v561
        %v619 = vpack.c.bf16 %v570, %v560
        %v620 = vpack.c.bf16 %v581, %v528
        %v621 = vpack.c.bf16 %v580, %v529
        %v622 = vpack.c.bf16 %v582, %v530
        %v623 = vpack.c.bf16 %v601, %v591
        %v624 = vpack.c.bf16 %v600, %v590
        %v625 = vpack.c.bf16 %v602, %v592
        %v626 = vpack.c.bf16 %v611, %v611
        %v627 = vpack.c.bf16 %v610, %v610
        %v628 = vpack.c.bf16 %v612, %v612
        %v629 = vld [vmem:[%s7] sm:$0xff]
        %631 = vset.pattern.permute.xlu0 0
        %632 = vperm.xlu0 %631, %v629
        %v633 = vpop.permute.xlu0 %632
        %vm635 = vcmask 588800
        %v637 = vsel %vm635, %v613, 0
        %v640 = vsel %vm417, %v626, 0
        %v643 = vsel %vm417, %v627, 0
        %v646 = vsel %vm417, %v628, 0
        %648 = vmatprep.subr.bf16.mxu0 %v615
        %649 = vmatpush1.bf16.msra.mxu0 %v614
        %650 = vmatprep.subr.bf16.mxu0 %v618
        %651 = vmatpush1.bf16.msra.mxu0 %v617
        %652 = vmatprep.subr.bf16.mxu0 %v621
        %653 = vmatpush1.bf16.msra.mxu0 %v620
        %654 = vmatprep.subr.bf16.mxu0 %v624
        %655 = vmatpush1.bf16.msra.mxu0 %v623
        %656 = vmatprep.subr.bf16.mxu0 %v643
        %657 = vmatpush1.bf16.msra.mxu0 %v640
        %658 = vmatprep.subr.bf16.mxu0 0
        %659 = vmatpush1.bf16.msra.mxu0 0
        %660 = vmatprep.subr.bf16.mxu0 0
        %661 = vmatpush1.bf16.msra.mxu0 0
        %662 = vmatprep.subr.bf16.mxu0 0
        %663 = vmatpush1.bf16.msra.mxu0 0
        %664 = vmatprep.subr.bf16.mxu0 0
        %665 = vmatpush1.bf16.msra.mxu0 0
        %666 = vmatprep.subr.bf16.mxu0 0
        %667 = vmatpush1.bf16.msra.mxu0 0
        %668 = vmatprep.subr.bf16.mxu0 0
        %669 = vmatpush1.bf16.msra.mxu0 0
        %670 = vmatprep.subr.bf16.mxu0 0
        %671 = vmatpush1.bf16.msra.mxu0 0
        %672 = vmatprep.subr.bf16.mxu0 0
        %673 = vmatpush1.bf16.msra.mxu0 0
        %674 = vmatprep.subr.bf16.mxu0 0
        %675 = vmatpush1.bf16.msra.mxu0 0
        %676 = vmatprep.subr.bf16.mxu0 0
        %677 = vmatpush1.bf16.msra.mxu0 0
        %678 = vmatprep.subr.bf16.mxu0 0
        %679 = vmatpush1.bf16.msra.mxu0 0
        %680 = vmatprep.mubr.bf16.mxu0 0
        %681 = vmatmul.mubr.bf16.gmra.mrb[0].mxu0 %v637
        %v682 = vpop.f32.mrb[0].mxu0
        %v683 = vadd.f32 %v633, %v682
        %v684 = vpop.f32.mrb[0].mxu0
        %v685 = vadd.f32 %v633, %v684
        %v686 = vpop.f32.mrb[0].mxu0
        %v687 = vpop.f32.mrb[0].mxu0
        %688 = vdwg.mxu0
        %689 = vmatprep.subr.bf16.mxu0 0
        %690 = vmatpush1.bf16.msra.mxu0 %v616
        %691 = vmatprep.subr.bf16.mxu0 0
        %692 = vmatpush1.bf16.msra.mxu0 %v619
        %693 = vmatprep.subr.bf16.mxu0 0
        %694 = vmatpush1.bf16.msra.mxu0 %v622
        %695 = vmatprep.subr.bf16.mxu0 0
        %696 = vmatpush1.bf16.msra.mxu0 %v625
        %697 = vmatprep.subr.bf16.mxu0 0
        %698 = vmatpush1.bf16.msra.mxu0 %v646
        %699 = vmatprep.subr.bf16.mxu0 0
        %700 = vmatpush1.bf16.msra.mxu0 0
        %701 = vmatprep.subr.bf16.mxu0 0
        %702 = vmatpush1.bf16.msra.mxu0 0
        %703 = vmatprep.subr.bf16.mxu0 0
        %704 = vmatpush1.bf16.msra.mxu0 0
        %705 = vmatprep.subr.bf16.mxu0 0
        %706 = vmatpush1.bf16.msra.mxu0 0
        %707 = vmatprep.subr.bf16.mxu0 0
        %708 = vmatpush1.bf16.msra.mxu0 0
        %709 = vmatprep.subr.bf16.mxu0 0
        %710 = vmatpush1.bf16.msra.mxu0 0
        %711 = vmatprep.subr.bf16.mxu0 0
        %712 = vmatpush1.bf16.msra.mxu0 0
        %713 = vmatprep.subr.bf16.mxu0 0
        %714 = vmatpush1.bf16.msra.mxu0 0
        %715 = vmatprep.subr.bf16.mxu0 0
        %716 = vmatpush1.bf16.msra.mxu0 0
        %717 = vmatprep.subr.bf16.mxu0 0
        %718 = vmatpush1.bf16.msra.mxu0 0
        %719 = vmatprep.subr.bf16.mxu0 0
        %720 = vmatpush1.bf16.msra.mxu0 0
        %721 = vmatprep.mubr.bf16.mxu0 0
        %722 = vmatmul.mubr.bf16.gmra.mrb[0].mxu0 %v637
        %v723 = vpop.f32.mrb[0].mxu0
        %v724 = vadd.f32 %v633, %v723
        %v725 = vpop.f32.mrb[0].mxu0
        %v726 = vpop.f32.mrb[0].mxu0
        %v727 = vpop.f32.mrb[0].mxu0
        %728 = vdwg.mxu0
        %v729 = vmax.f32 %v683, 0.0
        %v730 = vmax.f32 %v685, 0.0
        %v731 = vmax.f32 %v724, 0.0
        %v732 = vld [vmem:[%s8] sm:$0xf]
        %v733 = vpack.c.bf16 %v729, %v729
        %v734 = vpack.c.bf16 %v730, %v730
        %v735 = vpack.c.bf16 %v731, %v731
        %v736 = vld [vmem:[%s9] sm:$0xff]
        %738 = vset.pattern.permute.xlu0 0
        %739 = vperm.xlu0 %738, %v736
        %v740 = vpop.permute.xlu0 %739
        %v743 = vsel %vm413, %v732, 0
        %v746 = vsel %vm417, %v733, 0
        %v749 = vsel %vm417, %v734, 0
        %v752 = vsel %vm417, %v735, 0
        %754 = vmatprep.subr.bf16.mxu0 %v749
        %755 = vmatpush1.bf16.msra.mxu0 %v746
        %756 = vmatprep.subr.bf16.mxu0 0
        %757 = vmatpush1.bf16.msra.mxu0 0
        %758 = vmatprep.subr.bf16.mxu0 0
        %759 = vmatpush1.bf16.msra.mxu0 0
        %760 = vmatprep.subr.bf16.mxu0 0
        %761 = vmatpush1.bf16.msra.mxu0 0
        %762 = vmatprep.subr.bf16.mxu0 0
        %763 = vmatpush1.bf16.msra.mxu0 0
        %764 = vmatprep.subr.bf16.mxu0 0
        %765 = vmatpush1.bf16.msra.mxu0 0
        %766 = vmatprep.subr.bf16.mxu0 0
        %767 = vmatpush1.bf16.msra.mxu0 0
        %768 = vmatprep.subr.bf16.mxu0 0
        %769 = vmatpush1.bf16.msra.mxu0 0
        %770 = vmatprep.subr.bf16.mxu0 0
        %771 = vmatpush1.bf16.msra.mxu0 0
        %772 = vmatprep.subr.bf16.mxu0 0
        %773 = vmatpush1.bf16.msra.mxu0 0
        %774 = vmatprep.subr.bf16.mxu0 0
        %775 = vmatpush1.bf16.msra.mxu0 0
        %776 = vmatprep.subr.bf16.mxu0 0
        %777 = vmatpush1.bf16.msra.mxu0 0
        %778 = vmatprep.subr.bf16.mxu0 0
        %779 = vmatpush1.bf16.msra.mxu0 0
        %780 = vmatprep.subr.bf16.mxu0 0
        %781 = vmatpush1.bf16.msra.mxu0 0
        %782 = vmatprep.subr.bf16.mxu0 0
        %783 = vmatpush1.bf16.msra.mxu0 0
        %784 = vmatprep.subr.bf16.mxu0 0
        %785 = vmatpush1.bf16.msra.mxu0 0
        %786 = vmatprep.mubr.bf16.mxu0 0
        %787 = vmatmul.mubr.bf16.gmra.mrb[0].mxu0 %v743
        %v788 = vpop.f32.mrb[0].mxu0
        %v789 = vadd.f32 %v740, %v788
        %v790 = vpop.f32.mrb[0].mxu0
        %v791 = vadd.f32 %v740, %v790
        %v792 = vpop.f32.mrb[0].mxu0
        %v793 = vpop.f32.mrb[0].mxu0
        %794 = vdwg.mxu0
        %795 = vmatprep.subr.bf16.mxu0 0
        %796 = vmatpush1.bf16.msra.mxu0 %v752
        %797 = vmatprep.subr.bf16.mxu0 0
        %798 = vmatpush1.bf16.msra.mxu0 0
        %799 = vmatprep.subr.bf16.mxu0 0
        %800 = vmatpush1.bf16.msra.mxu0 0
        %801 = vmatprep.subr.bf16.mxu0 0
        %802 = vmatpush1.bf16.msra.mxu0 0
        %803 = vmatprep.subr.bf16.mxu0 0
        %804 = vmatpush1.bf16.msra.mxu0 0
        %805 = vmatprep.subr.bf16.mxu0 0
        %806 = vmatpush1.bf16.msra.mxu0 0
        %807 = vmatprep.subr.bf16.mxu0 0
        %808 = vmatpush1.bf16.msra.mxu0 0
        %809 = vmatprep.subr.bf16.mxu0 0
        %810 = vmatpush1.bf16.msra.mxu0 0
        %811 = vmatprep.subr.bf16.mxu0 0
        %812 = vmatpush1.bf16.msra.mxu0 0
        %813 = vmatprep.subr.bf16.mxu0 0
        %814 = vmatpush1.bf16.msra.mxu0 0
        %815 = vmatprep.subr.bf16.mxu0 0
        %816 = vmatpush1.bf16.msra.mxu0 0
        %817 = vmatprep.subr.bf16.mxu0 0
        %818 = vmatpush1.bf16.msra.mxu0 0
        %819 = vmatprep.subr.bf16.mxu0 0
        %820 = vmatpush1.bf16.msra.mxu0 0
        %821 = vmatprep.subr.bf16.mxu0 0
        %822 = vmatpush1.bf16.msra.mxu0 0
        %823 = vmatprep.subr.bf16.mxu0 0
        %824 = vmatpush1.bf16.msra.mxu0 0
        %825 = vmatprep.subr.bf16.mxu0 0
        %826 = vmatpush1.bf16.msra.mxu0 0
        %827 = vmatprep.mubr.bf16.mxu0 0
        %828 = vmatmul.mubr.bf16.gmra.mrb[0].mxu0 %v743
        %v829 = vpop.f32.mrb[0].mxu0
        %v830 = vadd.f32 %v740, %v829
        %v831 = vpop.f32.mrb[0].mxu0
        %v832 = vpop.f32.mrb[0].mxu0
        %v833 = vpop.f32.mrb[0].mxu0
        %834 = vdwg.mxu0
        %v835 = vadd.f32 %v789, %v379
        %v836 = vadd.f32 %v791, %v380
        %v837 = vadd.f32 %v830, %v381
        %838 = vst [vmem:[%s375] sm:$0xff] %v835
        %839 = vst [vmem:[%s375 + $0x8] sm:$0xff] %v836
        %840 = vst [vmem:[%s375 + $0x10] sm:$0xff] %v837
        %s841 = sand.u32 %s250, 1
        %s842 = scalar_lea.sflag [#allocation4], %s841
        %s843 = sand.u32 %s250, 1
        %s844 = smul.addr %s843, 24
        %s845 = scalar_lea.vmem [#allocation5], %s844
        // Predicated region
        $region65: #{tpu_custom_call.1} parent=59 // pred_check
          %p846 = pneg %p260
        $region66: #{tpu_custom_call.1} parent=59 // pred_check_branch
          %848 = sbr.rel (%p846) target = $region68
        $region67: #{tpu_custom_call.1} parent=59 // pred_region
          %s849 = smul.u32 3, %s27
          %s851 = ssub.s32 384, 384
          %852 = vsyncadd %s842, %s851
          %s853 = smul.addr %s849, 128
          %s854 = scalar_lea.hbm %s10, %s853
          %s856 = sshll.u32 %s845, 4
          %s857 = int_to_ptr.vmem [resolvable:$true] %s856
          %859 = dma.vmem_to_hbm [thread:$0]  %s857, 384, %s854, %s842
        $region68: #{tpu_custom_call.1} parent=59 // pred_fallthru
          _
      $region60: #{tpu_custom_call.1} parent=5 // pred_fallthru
        _
      %p860 = scmp.le.s32.totalorder 2, %s22
      // Predicated region
      $region69: #{tpu_custom_call.1} parent=5 // pred_check
        %p861 = pneg %p860
      $region70: #{tpu_custom_call.1} parent=5 // pred_check_branch
        %863 = sbr.rel (%p861) target = $region72
      $region71: #{tpu_custom_call.1} parent=5 // pred_region
        %s864 = ssub.s32 %s22, 2
        // Predicated region
        $region73: #{tpu_custom_call.1} parent=71 // pred_check
          %p865 = pneg %p266
        $region74: #{tpu_custom_call.1} parent=71 // pred_check_branch
          %867 = sbr.rel (%p865) target = $region76
        $region75: #{tpu_custom_call.1} parent=71 // pred_region
          %s868 = sand.u32 %s251, 1
          %s869 = scalar_lea.sflag [#allocation4], %s868
          %s870 = sand.u32 %s251, 1
          %s871 = smul.addr %s870, 24
          %s872 = scalar_lea.vmem [#allocation5], %s871
          %873 = dma.done %s869, 384
        $region76: #{tpu_custom_call.1} parent=71 // pred_fallthru
          _
      $region72: #{tpu_custom_call.1} parent=5 // pred_fallthru
        _
    $region6: #{tpu_custom_call.1} parent=1 // loop_footer
      %s26 = sadd.s32 1, %s22
    $region7: #{tpu_custom_call.1} parent=1 // loop_footer_branch
      %21 = sbr.rel target = $region3
    $region8: #{tpu_custom_call.1} parent=1 // loop_exit
      _
    %874 = vsyncpa [#allocation3], 1
    %s875 = scalar_lea.sflag [#allocation3], 1
    %876 = vsyncpa %s875, 1
    %877 = vsyncpa [#allocation4], 1
    %s878 = scalar_lea.sflag [#allocation4], 1
    %879 = vsyncpa %s878, 1

</llo_original>
